<compile_context>
chip_gen: v7x
topology: tpu7x:2x2x1
jax: 0.10.0
libtpu: 0.0.40
codegen_flags: <defaults>
</compile_context>

<pallas_src>
import functools

import jax
import jax.numpy as jnp
from jax.experimental import pallas as pl
from jax.experimental.pallas import tpu as pltpu


def _mlp_kernel(x_ref, w1_ref, b1_ref, w2_ref, b2_ref, o_ref, acc_ref):
    # x_ref:  (tm, H)      w1_ref: (H, tI)   b1_ref: (1, tI)
    # w2_ref: (tI, H)      b2_ref: (1, H)    o_ref:  (tm, H)
    # acc_ref: (tm, H) f32 scratch, accumulated across the I-tile grid axis.
    k = pl.program_id(1)

    @pl.when(k == 0)
    def _():
        acc_ref[...] = jnp.zeros_like(acc_ref)

    # fc1 partial for this I-tile (f32 accumulation on the MXU).
    h = jnp.dot(x_ref[...], w1_ref[...], preferred_element_type=jnp.float32)
    h = h + b1_ref[...].astype(jnp.float32)

    # gelu_pytorch_tanh: 0.5 * x * (1 + tanh(sqrt(2/pi) * (x + 0.044715 * x^3)))
    c = jnp.float32(0.7978845608028654)  # sqrt(2/pi)
    h = 0.5 * h * (1.0 + jnp.tanh(c * (h + 0.044715 * (h * h * h))))

    # fc2 partial, accumulated into the resident f32 scratch.
    acc_ref[...] += jnp.dot(h.astype(w2_ref.dtype), w2_ref[...],
                            preferred_element_type=jnp.float32)

    @pl.when(k == pl.num_programs(1) - 1)
    def _():
        o_ref[...] = (acc_ref[...] + b2_ref[...].astype(jnp.float32)).astype(o_ref.dtype)


def _round_up(a, b):
    return pl.cdiv(a, b) * b


@functools.partial(jax.jit, static_argnames=("tm", "ti"))
def siglip_mlp(hidden_states, w1, b1, w2, b2, *, tm=256, ti=1024):
    """hidden_states: [B, S, H]; w1: [H, I]; b1: [I]; w2: [I, H]; b2: [H]."""
    B, S, H = hidden_states.shape
    I = w1.shape[1]
    M = B * S

    # ---- row tile: big when possible; pad M so any token count works ----
    tm_eff = tm if M >= tm else max(8, _round_up(M, 8))
    Mp = _round_up(M, tm_eff)

    # ---- intermediate tile: stream weights over I when it is large ----
    if I <= ti:
        ti_eff = I
        Ip = I
    else:
        assert ti % 128 == 0, "intermediate tile must be a multiple of 128 lanes"
        ti_eff = ti
        Ip = _round_up(I, ti_eff)

    x2d = hidden_states.reshape(M, H)
    if Mp != M:
        x2d = jnp.pad(x2d, ((0, Mp - M), (0, 0)))
    if Ip != I:
        # Zero-padding I is exact: gelu(0) = 0 and padded w2 rows are zero.
        w1 = jnp.pad(w1, ((0, 0), (0, Ip - I)))
        b1 = jnp.pad(b1, ((0, Ip - I),))
        w2 = jnp.pad(w2, ((0, Ip - I), (0, 0)))

    b1_2d = b1.reshape(1, Ip)
    b2_2d = b2.reshape(1, H)

    # ---- VMEM budget: double-buffered tiles + f32 accumulator, with headroom ----
    xb = jnp.dtype(hidden_states.dtype).itemsize
    wb = jnp.dtype(w1.dtype).itemsize
    est = (2 * tm_eff * H * xb                   # x tile (double-buffered)
           + 2 * tm_eff * H * xb                 # out tile
           + 2 * (H * ti_eff + ti_eff * H) * wb  # w1/w2 tiles
           + 2 * (ti_eff + H) * wb               # biases
           + tm_eff * H * 4)                     # f32 accumulator scratch
    vmem_limit = int(min(max(2 * est, 32 * 1024 * 1024), 64 * 1024 * 1024))

    cost = pl.CostEstimate(
        flops=4 * M * H * I,
        transcendentals=M * I,
        bytes_accessed=(M * H * xb + w1.size * wb + w2.size * wb
                        + b1.size * wb + b2.size * wb + M * H * xb),
    )

    grid = (Mp // tm_eff, Ip // ti_eff)

    out2d = pl.pallas_call(
        _mlp_kernel,
        out_shape=jax.ShapeDtypeStruct((Mp, H), hidden_states.dtype),
        grid_spec=pltpu.PrefetchScalarGridSpec(
            num_scalar_prefetch=0,
            grid=grid,
            in_specs=[
                pl.BlockSpec((tm_eff, H), lambda i, k: (i, 0)),   # x rows (revisited over k)
                pl.BlockSpec((H, ti_eff), lambda i, k: (0, k)),   # fc1 weight I-tile
                pl.BlockSpec((1, ti_eff), lambda i, k: (0, k)),   # fc1 bias I-tile
                pl.BlockSpec((ti_eff, H), lambda i, k: (k, 0)),   # fc2 weight I-tile
                pl.BlockSpec((1, H), lambda i, k: (0, 0)),        # fc2 bias (constant)
            ],
            out_specs=pl.BlockSpec((tm_eff, H), lambda i, k: (i, 0)),
            scratch_shapes=[pltpu.VMEM((tm_eff, H), jnp.float32)],
        ),
        compiler_params=pltpu.CompilerParams(
            dimension_semantics=("parallel", "arbitrary"),
            vmem_limit_bytes=vmem_limit,
        ),
        cost_estimate=cost,
    )(x2d, w1, b1_2d, w2, b2_2d)

    return out2d[:M].reshape(B, S, H)


def _reference(hidden_states, w1, b1, w2, b2):
    h = hidden_states.astype(jnp.float32) @ w1.astype(jnp.float32) + b1.astype(jnp.float32)
    h = 0.5 * h * (1.0 + jnp.tanh(0.7978845608028654 * (h + 0.044715 * h ** 3)))
    y = h @ w2.astype(jnp.float32) + b2.astype(jnp.float32)
    return y.astype(hidden_states.dtype)


if __name__ == "__main__":
    key = jax.random.PRNGKey(0)

    # ---- Test 1: small config (batch=2, seq=8, hidden=32, intermediate=64) ----
    B, S, H, I = 2, 8, 32, 64
    kx, k1, k2, k3, k4, key = jax.random.split(key, 6)
    x = jax.random.normal(kx, (B, S, H), dtype=jnp.float32)
    w1 = jax.random.normal(k1, (H, I), dtype=jnp.float32) * 0.05
    b1 = jax.random.normal(k2, (I,), dtype=jnp.float32) * 0.05
    w2 = jax.random.normal(k3, (I, H), dtype=jnp.float32) * 0.05
    b2 = jax.random.normal(k4, (H,), dtype=jnp.float32) * 0.05

    out = jax.block_until_ready(siglip_mlp(x, w1, b1, w2, b2))
    ref = _reference(x, w1, b1, w2, b2)
    assert out.shape == (B, S, H)
    assert jnp.allclose(out, ref, atol=1e-5, rtol=1e-5), "mismatch vs reference (test 1)"

    # ---- Test 2: exercises M-padding and I-tiling (M=200 not a tile multiple, 3 I-tiles) ----
    B2, S2, H2, I2 = 2, 100, 128, 384
    kx, k1, k2, k3, k4, key = jax.random.split(key, 6)
    x_b = jax.random.normal(kx, (B2, S2, H2), dtype=jnp.float32)
    w1_b = jax.random.normal(k1, (H2, I2), dtype=jnp.float32) * 0.05
    b1_b = jax.random.normal(k2, (I2,), dtype=jnp.float32) * 0.05
    w2_b = jax.random.normal(k3, (I2, H2), dtype=jnp.float32) * 0.05
    b2_b = jax.random.normal(k4, (H2,), dtype=jnp.float32) * 0.05

    out_b = jax.block_until_ready(siglip_mlp(x_b, w1_b, b1_b, w2_b, b2_b, tm=64, ti=128))
    ref_b = _reference(x_b, w1_b, b1_b, w2_b, b2_b)
    assert out_b.shape == (B2, S2, H2)
    assert jnp.allclose(out_b, ref_b, atol=1e-4, rtol=1e-4), "mismatch vs reference (test 2)"

    print("KERNEL_OK")
</pallas_src>

<mosaic_0001>
module attributes {stable_mosaic.version = 11 : i64} {
  func.func @_mlp_kernel(%arg0: i32, %arg1: i32, %arg2: memref<16x32xf32, #tpu.memory_space<vmem>>, %arg3: memref<32x64xf32, #tpu.memory_space<vmem>>, %arg4: memref<1x64xf32, #tpu.memory_space<vmem>>, %arg5: memref<64x32xf32, #tpu.memory_space<vmem>>, %arg6: memref<1x32xf32, #tpu.memory_space<vmem>>, %arg7: memref<16x32xf32, #tpu.memory_space<vmem>>, %arg8: memref<16x32xf32, #tpu.memory_space<vmem>>) attributes {dimension_semantics = [#tpu.dimension_semantics<parallel>, #tpu.dimension_semantics<arbitrary>], iteration_bounds = array<i64: 1, 1>, scalar_prefetch = 0 : i64, scratch_operands = 1 : i64, tpu.core_type = #tpu.core_type<tc>, window_params = [{transform_indices = @transform_0, window_bounds = array<i64: 16, 32>}, {transform_indices = @transform_1, window_bounds = array<i64: 32, 64>}, {transform_indices = @transform_2, window_bounds = array<i64: 1, 64>}, {transform_indices = @transform_3, window_bounds = array<i64: 64, 32>}, {pipeline_mode = #tpu.pipeline_mode<synchronous>, transform_indices = @transform_4, window_bounds = array<i64: 1, 32>}, {transform_indices = @transform_5, window_bounds = array<i64: 16, 32>}]} {
    %c0_i32 = arith.constant 0 : i32
    %0 = arith.cmpi eq, %arg1, %c0_i32 : i32
    %1 = arith.extui %0 : i1 to i32
    %c0_i32_0 = arith.constant 0 : i32
    %2 = arith.cmpi ne, %1, %c0_i32_0 : i32
    scf.if %2 {
      %cst_19 = arith.constant 0.000000e+00 : f32
      %30 = vector.broadcast %cst_19 : f32 to vector<16x32xf32>
      %c0_20 = arith.constant 0 : index
      %c0_21 = arith.constant 0 : index
      %31 = vector.load %arg8[%c0_20, %c0_21] : memref<16x32xf32, #tpu.memory_space<vmem>>, vector<16x32xf32>
      tpu.vector_store %arg8[%c0_20, %c0_21], %30 {strides = array<i32>} : memref<16x32xf32, #tpu.memory_space<vmem>>, vector<16x32xf32>,
    } else {
    }
    %c0 = arith.constant 0 : index
    %c0_1 = arith.constant 0 : index
    %3 = vector.load %arg2[%c0, %c0_1] : memref<16x32xf32, #tpu.memory_space<vmem>>, vector<16x32xf32>
    %c0_2 = arith.constant 0 : index
    %c0_3 = arith.constant 0 : index
    %4 = vector.load %arg3[%c0_2, %c0_3] : memref<32x64xf32, #tpu.memory_space<vmem>>, vector<32x64xf32>
    %cst = arith.constant dense<0.000000e+00> : vector<16x64xf32>
    %5 = tpu.matmul %3, %4, %cst {dimension_numbers = #tpu.dot_dimension_numbers<[1], [0], [0], [1], [0, 0, 1, 1], [], []>} : vector<16x32xf32>, vector<32x64xf32>, vector<16x64xf32> -> vector<16x64xf32>
    %c0_4 = arith.constant 0 : index
    %c0_5 = arith.constant 0 : index
    %6 = vector.load %arg4[%c0_4, %c0_5] : memref<1x64xf32, #tpu.memory_space<vmem>>, vector<1x64xf32>
    %7 = vector.broadcast %6 : vector<1x64xf32> to vector<16x64xf32>
    %8 = arith.addf %5, %7 : vector<16x64xf32>
    %cst_6 = arith.constant 5.000000e-01 : f32
    %9 = vector.broadcast %cst_6 : f32 to vector<16x64xf32>
    %10 = arith.mulf %9, %8 : vector<16x64xf32>
    %11 = arith.mulf %8, %8 : vector<16x64xf32>
    %12 = arith.mulf %11, %8 : vector<16x64xf32>
    %cst_7 = arith.constant 4.471500e-02 : f32
    %13 = vector.broadcast %cst_7 : f32 to vector<16x64xf32>
    %14 = arith.mulf %13, %12 : vector<16x64xf32>
    %15 = arith.addf %8, %14 : vector<16x64xf32>
    %cst_8 = arith.constant 0.797884583 : f32
    %16 = vector.broadcast %cst_8 : f32 to vector<16x64xf32>
    %17 = arith.mulf %16, %15 : vector<16x64xf32>
    %18 = math.tanh %17 : vector<16x64xf32>
    %cst_9 = arith.constant 1.000000e+00 : f32
    %19 = vector.broadcast %cst_9 : f32 to vector<16x64xf32>
    %20 = arith.addf %19, %18 : vector<16x64xf32>
    %21 = arith.mulf %10, %20 : vector<16x64xf32>
    %c0_10 = arith.constant 0 : index
    %c0_11 = arith.constant 0 : index
    %22 = vector.load %arg8[%c0_10, %c0_11] : memref<16x32xf32, #tpu.memory_space<vmem>>, vector<16x32xf32>
    %c0_12 = arith.constant 0 : index
    %c0_13 = arith.constant 0 : index
    %23 = vector.load %arg5[%c0_12, %c0_13] : memref<64x32xf32, #tpu.memory_space<vmem>>, vector<64x32xf32>
    %cst_14 = arith.constant dense<0.000000e+00> : vector<16x32xf32>
    %24 = tpu.matmul %21, %23, %cst_14 {dimension_numbers = #tpu.dot_dimension_numbers<[1], [0], [0], [1], [0, 0, 1, 1], [], []>} : vector<16x64xf32>, vector<64x32xf32>, vector<16x32xf32> -> vector<16x32xf32>
    %25 = arith.addf %22, %24 : vector<16x32xf32>
    %c0_15 = arith.constant 0 : index
    %c0_16 = arith.constant 0 : index
    %26 = vector.load %arg8[%c0_15, %c0_16] : memref<16x32xf32, #tpu.memory_space<vmem>>, vector<16x32xf32>
    tpu.vector_store %arg8[%c0_15, %c0_16], %25 {strides = array<i32>} : memref<16x32xf32, #tpu.memory_space<vmem>>, vector<16x32xf32>,
    %c0_i32_17 = arith.constant 0 : i32
    %27 = arith.cmpi eq, %arg1, %c0_i32_17 : i32
    %28 = arith.extui %27 : i1 to i32
    %c0_i32_18 = arith.constant 0 : i32
    %29 = arith.cmpi ne, %28, %c0_i32_18 : i32
    scf.if %29 {
      %c0_19 = arith.constant 0 : index
      %c0_20 = arith.constant 0 : index
      %30 = vector.load %arg8[%c0_19, %c0_20] : memref<16x32xf32, #tpu.memory_space<vmem>>, vector<16x32xf32>
      %c0_21 = arith.constant 0 : index
      %c0_22 = arith.constant 0 : index
      %31 = vector.load %arg6[%c0_21, %c0_22] : memref<1x32xf32, #tpu.memory_space<vmem>>, vector<1x32xf32>
      %32 = vector.broadcast %31 : vector<1x32xf32> to vector<16x32xf32>
      %33 = arith.addf %30, %32 : vector<16x32xf32>
      %c0_23 = arith.constant 0 : index
      %c0_24 = arith.constant 0 : index
      %34 = vector.load %arg7[%c0_23, %c0_24] : memref<16x32xf32, #tpu.memory_space<vmem>>, vector<16x32xf32>
      tpu.vector_store %arg7[%c0_23, %c0_24], %33 {strides = array<i32>} : memref<16x32xf32, #tpu.memory_space<vmem>>, vector<16x32xf32>,
    } else {
    }
    return
  }
  func.func @transform_0(%arg0: i32, %arg1: i32) -> (i32, i32) {
    %c0_i32 = arith.constant 0 : i32
    %c0_i32_0 = arith.constant 0 : i32
    return %arg0, %c0_i32 : i32, i32
  }
  func.func @transform_1(%arg0: i32, %arg1: i32) -> (i32, i32) {
    %c0_i32 = arith.constant 0 : i32
    %c0_i32_0 = arith.constant 0 : i32
    return %c0_i32, %arg1 : i32, i32
  }
  func.func @transform_2(%arg0: i32, %arg1: i32) -> (i32, i32) {
    %c0_i32 = arith.constant 0 : i32
    %c0_i32_0 = arith.constant 0 : i32
    return %c0_i32, %arg1 : i32, i32
  }
  func.func @transform_3(%arg0: i32, %arg1: i32) -> (i32, i32) {
    %c0_i32 = arith.constant 0 : i32
    %c0_i32_0 = arith.constant 0 : i32
    return %arg1, %c0_i32 : i32, i32
  }
  func.func @transform_4(%arg0: i32, %arg1: i32) -> (i32, i32) {
    %c0_i32 = arith.constant 0 : i32
    %c0_i32_0 = arith.constant 0 : i32
    %c0_i32_1 = arith.constant 0 : i32
    return %c0_i32, %c0_i32_0 : i32, i32
  }
  func.func @transform_5(%arg0: i32, %arg1: i32) -> (i32, i32) {
    %c0_i32 = arith.constant 0 : i32
    %c0_i32_0 = arith.constant 0 : i32
    return %arg0, %c0_i32 : i32, i32
  }
}

</mosaic_0001>

<llo_original>
// kernel: siglip_mlp.1
$region0: #{siglip_mlp.1}
  #allocation0 [shape = 'u32[]', space=smem, size = 0x4, offset = 0x4, fixed_abs, tag = 'smem constant byte address 0x4 - core index']
  #allocation1 [shape = 'u32[144,128]{1,0:T(1,128)}', space=vmem, size = 0x12000, scoped, tag = 'internal scratch']
  #allocation2 [shape = 'f32[16,32]{1,0:T(8,128)}', space=vmem, size = 0x2000, scoped, tag = 'scratch operand']
  %s0 = inlined_call_operand.vmem [shape: f32[16,32], index: 0, kind: input, shape index: {}]
  %s1 = inlined_call_operand.vmem [shape: f32[32,64], index: 1, kind: input, shape index: {}]
  %s2 = inlined_call_operand.vmem [shape: f32[1,64], index: 2, kind: input, shape index: {}]
  %s3 = inlined_call_operand.vmem [shape: f32[64,32], index: 3, kind: input, shape index: {}]
  %s4 = inlined_call_operand.vmem [shape: f32[1,32], index: 4, kind: input, shape index: {}]
  %s5 = inlined_call_operand.hbm [shape: f32[16,32], index: 5, kind: output, shape index: {}]
  %s6 = sld [smem:[#allocation0]]
  $region38: #{siglip_mlp.1} parent=0
    _
  %s8 = ssub.s32 1, %s6
  %s9 = scalar_select 0, %s8, %s6
  $region1: #{siglip_mlp.1} parent=0
    #allocation3 [shape = 'u8[8192]{0}', space=vmem, size = 0x2000, scoped, tag = 'output window, operand 0, single buffered']
    #allocation4 [shape = 's32[1]{0}', space=sflag, size = 0x4, scoped, tag = 'scoped memory for siglip_mlp.1']
    %10 = vsyncpa [#allocation4], 0
    // Predicated region
    $region2: #{siglip_mlp.1} parent=1 // pred_check
      _
    $region3: #{siglip_mlp.1} parent=1 // pred_check_branch
      %12 = sbr.rel (0) target = $region5
    $region4: #{siglip_mlp.1} parent=1 // pred_region
      _
    $region5: #{siglip_mlp.1} parent=1 // pred_fallthru
      _
    // Predicated region
    $region6: #{siglip_mlp.1} parent=1 // pred_check
      _
    $region7: #{siglip_mlp.1} parent=1 // pred_check_branch
      %14 = sbr.rel (0) target = $region9
    $region8: #{siglip_mlp.1} parent=1 // pred_region
      _
    $region9: #{siglip_mlp.1} parent=1 // pred_fallthru
      _
    // Predicated region
    $region10: #{siglip_mlp.1} parent=1 // pred_check
      _
    $region11: #{siglip_mlp.1} parent=1 // pred_check_branch
      %16 = sbr.rel (0) target = $region13
    $region12: #{siglip_mlp.1} parent=1 // pred_region
      _
    $region13: #{siglip_mlp.1} parent=1 // pred_fallthru
      _
    // Predicated region
    $region14: #{siglip_mlp.1} parent=1 // pred_check
      _
    $region15: #{siglip_mlp.1} parent=1 // pred_check_branch
      %18 = sbr.rel (0) target = $region17
    $region16: #{siglip_mlp.1} parent=1 // pred_region
      _
    $region17: #{siglip_mlp.1} parent=1 // pred_fallthru
      _
    // Predicated region
    $region18: #{siglip_mlp.1} parent=1 // pred_check
      _
    $region19: #{siglip_mlp.1} parent=1 // pred_check_branch
      %20 = sbr.rel (0) target = $region21
    $region20: #{siglip_mlp.1} parent=1 // pred_region
      _
    $region21: #{siglip_mlp.1} parent=1 // pred_fallthru
      _
    %p21 = scmp.eq.s32.totalorder 0, 0
    // Predicated region
    $region22: #{siglip_mlp.1} parent=1 // pred_check
      %p22 = pneg %p21
    $region23: #{siglip_mlp.1} parent=1 // pred_check_branch
      %24 = sbr.rel (%p22) target = $region25
    $region24: #{siglip_mlp.1} parent=1 // pred_region
      %vm25 = vcmask 261120
      %26 = vst.msk [vmem:[#allocation2] sm:$0xff] %vm25, 0.0
      %27 = vst.msk [vmem:[#allocation2 + $0x8] sm:$0xff] %vm25, 0.0
    $region25: #{siglip_mlp.1} parent=1 // pred_fallthru
      _
    %v28 = vld [vmem:[%s0] sm:$0xff]
    %v29 = vld [vmem:[%s0 + $0x8] sm:$0xff]
    %v30 = vld [vmem:[%s1] sm:$0xff]
    %v31 = vld [vmem:[%s1 + $0x8] sm:$0xff]
    %v32 = vld [vmem:[%s1 + $0x10] sm:$0xff]
    %v33 = vld [vmem:[%s1 + $0x18] sm:$0xff]
    %v34 = vld [vmem:[%s2] sm:$0x1]
    %v36 = vlaneseq
    %v37 = vshrl.u32 %v36, 7
    %v38 = vsub.s32 0, %v37
    %v39 = vrot.slane %v34, %v38
    %vm41 = vcmask 261120
    %v43 = vsel %vm41, %v28, 0
    %v46 = vsel %vm41, %v29, 0
    %48 = vmatprep.subr.mxu0 0.0
    %49 = vmatpush1.msra.mxu0 %v30
    %50 = vmatprep.subr.mxu0 0.0
    %51 = vmatpush1.msra.mxu0 %v31
    %52 = vmatprep.subr.mxu0 0.0
    %53 = vmatpush1.msra.mxu0 %v32
    %54 = vmatprep.subr.mxu0 0.0
    %55 = vmatpush1.msra.mxu0 %v33
    %56 = vmatprep.subr.mxu0 0.0
    %57 = vmatpush1.msra.mxu0 0.0
    %58 = vmatprep.subr.mxu0 0.0
    %59 = vmatpush1.msra.mxu0 0.0
    %60 = vmatprep.subr.mxu0 0.0
    %61 = vmatpush1.msra.mxu0 0.0
    %62 = vmatprep.subr.mxu0 0.0
    %63 = vmatpush1.msra.mxu0 0.0
    %64 = vmatprep.subr.mxu0 0.0
    %65 = vmatpush1.msra.mxu0 0.0
    %66 = vmatprep.subr.mxu0 0.0
    %67 = vmatpush1.msra.mxu0 0.0
    %68 = vmatprep.subr.mxu0 0.0
    %69 = vmatpush1.msra.mxu0 0.0
    %70 = vmatprep.subr.mxu0 0.0
    %71 = vmatpush1.msra.mxu0 0.0
    %72 = vmatprep.subr.mxu0 0.0
    %73 = vmatpush1.msra.mxu0 0.0
    %74 = vmatprep.subr.mxu0 0.0
    %75 = vmatpush1.msra.mxu0 0.0
    %76 = vmatprep.subr.mxu0 0.0
    %77 = vmatpush1.msra.mxu0 0.0
    %78 = vmatprep.subr.mxu0 0.0
    %79 = vmatpush1.msra.mxu0 0.0
    %80 = vmatprep.subr.mxu0 0.0
    %81 = vmatpush1.msra.mxu0 0.0
    %82 = vmatprep.subr.mxu0 0.0
    %83 = vmatpush1.msra.mxu0 0.0
    %84 = vmatprep.subr.mxu0 0.0
    %85 = vmatpush1.msra.mxu0 0.0
    %86 = vmatprep.subr.mxu0 0.0
    %87 = vmatpush1.msra.mxu0 0.0
    %88 = vmatprep.subr.mxu0 0.0
    %89 = vmatpush1.msra.mxu0 0.0
    %90 = vmatprep.subr.mxu0 0.0
    %91 = vmatpush1.msra.mxu0 0.0
    %92 = vmatprep.subr.mxu0 0.0
    %93 = vmatpush1.msra.mxu0 0.0
    %94 = vmatprep.subr.mxu0 0.0
    %95 = vmatpush1.msra.mxu0 0.0
    %96 = vmatprep.subr.mxu0 0.0
    %97 = vmatpush1.msra.mxu0 0.0
    %98 = vmatprep.subr.mxu0 0.0
    %99 = vmatpush1.msra.mxu0 0.0
    %100 = vmatprep.subr.mxu0 0.0
    %101 = vmatpush1.msra.mxu0 0.0
    %102 = vmatprep.subr.mxu0 0.0
    %103 = vmatpush1.msra.mxu0 0.0
    %104 = vmatprep.subr.mxu0 0.0
    %105 = vmatpush1.msra.mxu0 0.0
    %106 = vmatprep.subr.mxu0 0.0
    %107 = vmatpush1.msra.mxu0 0.0
    %108 = vmatprep.subr.mxu0 0.0
    %109 = vmatpush1.msra.mxu0 0.0
    %110 = vmatprep.subr.mxu0 0.0
    %111 = vmatpush1.msra.mxu0 0.0
    %112 = vmatprep.mubr.f32.mxu0 0.0
    %113 = vmatmul.mubr.f32.gmra.mrb[0].mxu0 %v43
    %v114 = vpop.f32.mrb[0].mxu0
    %v115 = vadd.f32 %v39, %v114
    %v116 = vpop.f32.mrb[0].mxu0
    %117 = vmatprep.mubr.f32.mxu0 0.0
    %118 = vmatmul.mubr.f32.gmra.mrb[0].mxu0 %v46
    %v119 = vpop.f32.mrb[0].mxu0
    %v120 = vadd.f32 %v39, %v119
    %v121 = vpop.f32.mrb[0].mxu0
    %122 = vdwg.mxu0
    %v123 = vmul.f32 %v115, 0.5
    %v124 = vmul.f32 %v120, 0.5
    %v125 = vmul.f32 %v115, %v115
    %v126 = vmul.f32 %v120, %v120
    %v127 = vmul.f32 %v125, %v115
    %v128 = vmul.f32 %v126, %v120
    %v129 = vmul.f32 %v127, 0.044715
    %v130 = vmul.f32 %v128, 0.044715
    %v131 = vadd.f32 %v115, %v129
    %v132 = vadd.f32 %v120, %v130
    %v133 = vmul.f32 %v131, 0.7978846
    %v134 = vmul.f32 %v132, 0.7978846
    %v135 = vtanh.pop %v133
    %v136 = vtanh.pop %v134
    %v137 = vadd.f32 %v135, 1.0
    %v138 = vadd.f32 %v136, 1.0
    %v139 = vmul.f32 %v123, %v137
    %v140 = vmul.f32 %v124, %v138
    %v141 = vld [vmem:[#allocation2] sm:$0xff]
    %v142 = vld [vmem:[#allocation2 + $0x8] sm:$0xff]
    %v143 = vld [vmem:[%s3] sm:$0xff]
    %v144 = vld [vmem:[%s3 + $0x8] sm:$0xff]
    %v145 = vld [vmem:[%s3 + $0x10] sm:$0xff]
    %v146 = vld [vmem:[%s3 + $0x18] sm:$0xff]
    %v147 = vld [vmem:[%s3 + $0x20] sm:$0xff]
    %v148 = vld [vmem:[%s3 + $0x28] sm:$0xff]
    %v149 = vld [vmem:[%s3 + $0x30] sm:$0xff]
    %v150 = vld [vmem:[%s3 + $0x38] sm:$0xff]
    %vm151 = vcmask 523264
    %v153 = vsel %vm151, %v139, 0
    %v156 = vsel %vm151, %v140, 0
    %158 = vmatprep.subr.mxu0 0.0
    %159 = vmatpush1.msra.mxu0 %v143
    %160 = vmatprep.subr.mxu0 0.0
    %161 = vmatpush1.msra.mxu0 %v144
    %162 = vmatprep.subr.mxu0 0.0
    %163 = vmatpush1.msra.mxu0 %v145
    %164 = vmatprep.subr.mxu0 0.0
    %165 = vmatpush1.msra.mxu0 %v146
    %166 = vmatprep.subr.mxu0 0.0
    %167 = vmatpush1.msra.mxu0 %v147
    %168 = vmatprep.subr.mxu0 0.0
    %169 = vmatpush1.msra.mxu0 %v148
    %170 = vmatprep.subr.mxu0 0.0
    %171 = vmatpush1.msra.mxu0 %v149
    %172 = vmatprep.subr.mxu0 0.0
    %173 = vmatpush1.msra.mxu0 %v150
    %174 = vmatprep.subr.mxu0 0.0
    %175 = vmatpush1.msra.mxu0 0.0
    %176 = vmatprep.subr.mxu0 0.0
    %177 = vmatpush1.msra.mxu0 0.0
    %178 = vmatprep.subr.mxu0 0.0
    %179 = vmatpush1.msra.mxu0 0.0
    %180 = vmatprep.subr.mxu0 0.0
    %181 = vmatpush1.msra.mxu0 0.0
    %182 = vmatprep.subr.mxu0 0.0
    %183 = vmatpush1.msra.mxu0 0.0
    %184 = vmatprep.subr.mxu0 0.0
    %185 = vmatpush1.msra.mxu0 0.0
    %186 = vmatprep.subr.mxu0 0.0
    %187 = vmatpush1.msra.mxu0 0.0
    %188 = vmatprep.subr.mxu0 0.0
    %189 = vmatpush1.msra.mxu0 0.0
    %190 = vmatprep.subr.mxu0 0.0
    %191 = vmatpush1.msra.mxu0 0.0
    %192 = vmatprep.subr.mxu0 0.0
    %193 = vmatpush1.msra.mxu0 0.0
    %194 = vmatprep.subr.mxu0 0.0
    %195 = vmatpush1.msra.mxu0 0.0
    %196 = vmatprep.subr.mxu0 0.0
    %197 = vmatpush1.msra.mxu0 0.0
    %198 = vmatprep.subr.mxu0 0.0
    %199 = vmatpush1.msra.mxu0 0.0
    %200 = vmatprep.subr.mxu0 0.0
    %201 = vmatpush1.msra.mxu0 0.0
    %202 = vmatprep.subr.mxu0 0.0
    %203 = vmatpush1.msra.mxu0 0.0
    %204 = vmatprep.subr.mxu0 0.0
    %205 = vmatpush1.msra.mxu0 0.0
    %206 = vmatprep.subr.mxu0 0.0
    %207 = vmatpush1.msra.mxu0 0.0
    %208 = vmatprep.subr.mxu0 0.0
    %209 = vmatpush1.msra.mxu0 0.0
    %210 = vmatprep.subr.mxu0 0.0
    %211 = vmatpush1.msra.mxu0 0.0
    %212 = vmatprep.subr.mxu0 0.0
    %213 = vmatpush1.msra.mxu0 0.0
    %214 = vmatprep.subr.mxu0 0.0
    %215 = vmatpush1.msra.mxu0 0.0
    %216 = vmatprep.subr.mxu0 0.0
    %217 = vmatpush1.msra.mxu0 0.0
    %218 = vmatprep.subr.mxu0 0.0
    %219 = vmatpush1.msra.mxu0 0.0
    %220 = vmatprep.subr.mxu0 0.0
    %221 = vmatpush1.msra.mxu0 0.0
    %222 = vmatprep.mubr.f32.mxu0 0.0
    %223 = vmatmul.mubr.f32.gmra.mrb[0].mxu0 %v153
    %v224 = vpop.f32.mrb[0].mxu0
    %v225 = vadd.f32 0.0, %v224
    %v226 = vpop.f32.mrb[0].mxu0
    %227 = vmatprep.mubr.f32.mxu0 0.0
    %228 = vmatmul.mubr.f32.gmra.mrb[0].mxu0 %v156
    %v229 = vpop.f32.mrb[0].mxu0
    %v230 = vadd.f32 0.0, %v229
    %v231 = vpop.f32.mrb[0].mxu0
    %232 = vdwg.mxu0
    %v233 = vadd.f32 %v141, %v225
    %v234 = vadd.f32 %v142, %v230
    %235 = vst.msk [vmem:[#allocation2] sm:$0xff] %vm41, %v233
    %236 = vst.msk [vmem:[#allocation2 + $0x8] sm:$0xff] %vm41, %v234
    // Predicated region
    $region26: #{siglip_mlp.1} parent=1 // pred_check
      %p237 = pneg %p21
    $region27: #{siglip_mlp.1} parent=1 // pred_check_branch
      %239 = sbr.rel (%p237) target = $region29
    $region28: #{siglip_mlp.1} parent=1 // pred_region
      %v240 = vld [vmem:[#allocation2] sm:$0xff]
      %v241 = vld [vmem:[#allocation2 + $0x8] sm:$0xff]
      %v242 = vld [vmem:[%s4] sm:$0x1]
      %v244 = vlaneseq
      %v245 = vshrl.u32 %v244, 7
      %v246 = vsub.s32 0, %v245
      %v247 = vrot.slane %v242, %v246
      %v249 = vadd.f32 %v240, %v247
      %v250 = vadd.f32 %v241, %v247
      %251 = vst.msk [vmem:[#allocation3] sm:$0xff] %vm41, %v249
      %252 = vst.msk [vmem:[#allocation3 + $0x8] sm:$0xff] %vm41, %v250
    $region29: #{siglip_mlp.1} parent=1 // pred_fallthru
      _
    // Predicated region
    $region30: #{siglip_mlp.1} parent=1 // pred_check
      _
    $region31: #{siglip_mlp.1} parent=1 // pred_check_branch
      %254 = sbr.rel (0) target = $region33
    $region32: #{siglip_mlp.1} parent=1 // pred_region
      %s256 = ssub.s32 256, 256
      %257 = vsyncadd [#allocation4], %s256
      %s258 = sshll.u32 [#allocation3], 4
      %s259 = int_to_ptr.vmem [resolvable:$true] %s258
      %264 = dma.vmem_to_hbm [thread:$0]  %s259, 256, %s5, [#allocation4], 128, 128, 8
    $region33: #{siglip_mlp.1} parent=1 // pred_fallthru
      _
    // Predicated region
    $region34: #{siglip_mlp.1} parent=1 // pred_check
      _
    $region35: #{siglip_mlp.1} parent=1 // pred_check_branch
      %266 = sbr.rel (0) target = $region37
    $region36: #{siglip_mlp.1} parent=1 // pred_region
      %267 = dma.done [#allocation4], 256
    $region37: #{siglip_mlp.1} parent=1 // pred_fallthru
      _
    %268 = vsyncpa [#allocation4], 1

</llo_original>
